<compile_context>
chip_gen: v7x
topology: tpu7x:2x2x1
jax: 0.10.0
libtpu: 0.0.40
codegen_flags: <defaults>
</compile_context>

<pallas_src>
import math
from functools import partial

import jax
import jax.numpy as jnp
from jax import lax
from jax.experimental import pallas as pl
from jax.experimental.pallas import tpu as pltpu


def _round_up(v, m):
    return (v + m - 1) // m * m


def _epilogue(acc, s, b, neg_slope, out_dtype):
    """Fused per-output-channel scale, bias add, optional LeakyReLU (f32)."""
    out = acc * s + b
    if neg_slope is not None:
        out = jnp.where(out >= 0.0, out, out * neg_slope)
    return out.astype(out_dtype)


def _linear_elr_kernel_acc(x_ref, w_ref, s_ref, b_ref, o_ref, acc_ref, *, neg_slope):
    """One (tm, tn) output tile accumulated over the (innermost) K grid axis.

    x_ref:   (tm, tk) bf16  activation tile
    w_ref:   (tn, tk) bf16  weight tile, PyTorch (outch, inch) layout
    s_ref:   (1,  tn) f32   per-output-channel scale (gain [/ row-norm])
    b_ref:   (1,  tn) f32   bias tile
    o_ref:   (tm, tn) f32   output tile
    acc_ref: (tm, tn) f32   VMEM accumulator (resident across the K axis)
    """
    k = pl.program_id(2)

    @pl.when(k == 0)
    def _():
        acc_ref[...] = jnp.zeros_like(acc_ref)

    # x @ w.T without transposing the weight: contract dim 1 with dim 1 (MXU).
    acc_ref[...] += lax.dot_general(
        x_ref[...], w_ref[...],
        dimension_numbers=(((1,), (1,)), ((), ())),
        preferred_element_type=jnp.float32)

    @pl.when(k == pl.num_programs(2) - 1)
    def _():
        o_ref[...] = _epilogue(acc_ref[...], s_ref[...], b_ref[...],
                               neg_slope, o_ref.dtype)


def _linear_elr_kernel_1k(x_ref, w_ref, s_ref, b_ref, o_ref, *, neg_slope):
    """Single-K-step specialization: no accumulator scratch, direct store."""
    acc = lax.dot_general(
        x_ref[...], w_ref[...],
        dimension_numbers=(((1,), (1,)), ((), ())),
        preferred_element_type=jnp.float32)
    o_ref[...] = _epilogue(acc, s_ref[...], b_ref[...], neg_slope, o_ref.dtype)


def linear_elr_forward(x, weight, bias, *, lrmult=1.0, norm=None,
                       act_negative_slope=None, compute_dtype=jnp.bfloat16,
                       tm=None, tn=None, tk=None):
    """Pallas forward for LinearELR (un-fused path of the PyTorch module).

    x: (B, inch) f32, weight: (outch, inch) f32 (PyTorch layout), bias: (outch,).
    act_negative_slope: None = no activation, 0.0 = ReLU, >0 = LeakyReLU.
    Returns (B, outch) f32.
    """
    B, inch = x.shape
    outch, inch_w = weight.shape
    assert inch == inch_w
    assert bias.shape == (outch,)

    # actgain matches nn.init.calculate_gain for the supported activations.
    if act_negative_slope is None:
        actgain = 1.0
    else:
        actgain = math.sqrt(2.0 / (1.0 + float(act_negative_slope) ** 2))
    weightgain = actgain
    if norm is None:
        weightgain = weightgain * (1.0 / math.sqrt(inch)) * lrmult

    # Per-output-channel epilogue scale.  For 'demod' the row-norm division
    # commutes with the matmul, so it folds into this vector — no normalized
    # weight copy is ever materialized in HBM.
    if norm == 'demod':
        w32 = weight.astype(jnp.float32)
        row_norm = jnp.sqrt(jnp.sum(w32 * w32, axis=1))            # (outch,)
        scale = weightgain / jnp.maximum(row_norm, 1e-12)           # F.normalize eps
    else:
        scale = jnp.full((outch,), weightgain, dtype=jnp.float32)

    # Tile sizes: lane-dense output (tn mult of 128), tk mult of 128, tm mult
    # of 16 (bf16 sublane packing).  Capped so small shapes don't over-pad;
    # large shapes get MXU-friendly 256/512 tiles well within VMEM budgets on
    # v5e/v6e/v7x (double-buffered bf16 x/w tiles + f32 acc << 48 MiB).
    tm = tm if tm is not None else min(256, _round_up(B, 16))
    tn = tn if tn is not None else min(512, _round_up(outch, 128))
    tk = tk if tk is not None else min(512, _round_up(inch, 128))

    Mp, Np, Kp = _round_up(B, tm), _round_up(outch, tn), _round_up(inch, tk)

    if (Mp, Kp) != (B, inch):
        x = jnp.pad(x, ((0, Mp - B), (0, Kp - inch)))
    w = weight
    if (Np, Kp) != (outch, inch):
        w = jnp.pad(w, ((0, Np - outch), (0, Kp - inch)))
    b2 = bias.astype(jnp.float32)
    if Np != outch:
        b2 = jnp.pad(b2, (0, Np - outch))
        scale = jnp.pad(scale, (0, Np - outch))
    b2 = b2.reshape(1, Np)
    s2 = scale.reshape(1, Np).astype(jnp.float32)

    # TODO(synk): for static weights, cache the bf16-cast (and padded) weight
    # across calls instead of re-casting in the per-call hot path.
    x_c = x.astype(compute_dtype)
    w_c = w.astype(compute_dtype)

    nm, nn_blocks, nk = Mp // tm, Np // tn, Kp // tk
    neg = None if act_negative_slope is None else float(act_negative_slope)

    if nk == 1:
        # Common case (inch <= 512): skip the accumulator scratch round trip.
        kernel = partial(_linear_elr_kernel_1k, neg_slope=neg)
        grid = (nm, nn_blocks)
        in_specs = [
            pl.BlockSpec((tm, tk), lambda i, j: (i, 0)),   # x tile
            pl.BlockSpec((tn, tk), lambda i, j: (j, 0)),   # weight (N,K) tile
            pl.BlockSpec((1, tn), lambda i, j: (0, j)),    # scale tile
            pl.BlockSpec((1, tn), lambda i, j: (0, j)),    # bias tile
        ]
        out_specs = pl.BlockSpec((tm, tn), lambda i, j: (i, j))
        scratch_shapes = []
        dims = ("parallel", "parallel")
    else:
        kernel = partial(_linear_elr_kernel_acc, neg_slope=neg)
        grid = (nm, nn_blocks, nk)
        in_specs = [
            pl.BlockSpec((tm, tk), lambda i, j, k: (i, k)),   # x tile
            pl.BlockSpec((tn, tk), lambda i, j, k: (j, k)),   # weight (N,K) tile
            pl.BlockSpec((1, tn), lambda i, j, k: (0, j)),    # scale tile
            pl.BlockSpec((1, tn), lambda i, j, k: (0, j)),    # bias tile
        ]
        out_specs = pl.BlockSpec((tm, tn), lambda i, j, k: (i, j))
        scratch_shapes = [pltpu.VMEM((tm, tn), jnp.float32)]
        dims = ("parallel", "parallel", "arbitrary")

    out = pl.pallas_call(
        kernel,
        out_shape=jax.ShapeDtypeStruct((Mp, Np), jnp.float32),
        grid_spec=pltpu.PrefetchScalarGridSpec(
            num_scalar_prefetch=0,
            grid=grid,
            in_specs=in_specs,
            out_specs=out_specs,
            scratch_shapes=scratch_shapes,
        ),
        compiler_params=pltpu.CompilerParams(
            dimension_semantics=dims,
            vmem_limit_bytes=48 * 1024 * 1024,
        ),
    )(x_c, w_c, s2, b2)

    if (Mp, Np) != (B, outch):
        out = out[:B, :outch]
    return out


def linear_elr_reference(x, weight, bias, *, lrmult=1.0, norm=None,
                         act_negative_slope=None):
    """Pure-JAX f32 reference matching the PyTorch forward (un-fused path)."""
    if act_negative_slope is None:
        actgain = 1.0
    else:
        actgain = math.sqrt(2.0 / (1.0 + float(act_negative_slope) ** 2))
    inch = x.shape[1]
    weightgain = actgain
    if norm is None:
        weightgain = weightgain * (1.0 / math.sqrt(inch)) * lrmult
    w = weight
    if norm == 'demod':
        w = w / jnp.maximum(jnp.linalg.norm(w, axis=1, keepdims=True), 1e-12)
    out = weightgain * (x @ w.T) + bias[None, :]
    if act_negative_slope is not None:
        out = jnp.where(out >= 0.0, out, out * act_negative_slope)
    return out


if __name__ == "__main__":
    key = jax.random.PRNGKey(0)
    kx, kw, kb, kx3, kw3 = jax.random.split(key, 5)

    # Shapes consistent with the module: batch=8, inch=32, outch=64.
    B, inch, outch = 8, 32, 64
    lrmult = 1.0
    x = jax.random.normal(kx, (B, inch), dtype=jnp.float32)
    # __init__: weight = randn(outch, inch) / lrmult ; bias initialized to 0
    weight = jax.random.normal(kw, (outch, inch), dtype=jnp.float32) / lrmult
    # use a small nonzero bias so the bias path is exercised
    bias = 0.1 * jax.random.normal(kb, (outch,), dtype=jnp.float32)

    # Case 1: norm=None, act=None  (plain equalized-LR linear)
    out1 = jax.block_until_ready(
        linear_elr_forward(x, weight, bias, lrmult=lrmult,
                           norm=None, act_negative_slope=None))
    ref1 = linear_elr_reference(x, weight, bias, lrmult=lrmult,
                                norm=None, act_negative_slope=None)
    assert out1.shape == (B, outch)
    assert jnp.allclose(out1, ref1, atol=7.5e-2, rtol=5e-2), "mismatch (norm=None)"

    # Case 2: norm='demod', act=LeakyReLU(0.2) — demod folded into epilogue scale
    out2 = jax.block_until_ready(
        linear_elr_forward(x, weight, bias, lrmult=lrmult,
                           norm='demod', act_negative_slope=0.2))
    ref2 = linear_elr_reference(x, weight, bias, lrmult=lrmult,
                                norm='demod', act_negative_slope=0.2)
    assert out2.shape == (B, outch)
    assert jnp.allclose(out2, ref2, atol=7.5e-2, rtol=5e-2), "mismatch (demod+lrelu)"

    # Case 3: force the K-accumulating path (nk > 1) with a small tk override.
    inch3 = 256
    x3 = jax.random.normal(kx3, (B, inch3), dtype=jnp.float32)
    w3 = jax.random.normal(kw3, (outch, inch3), dtype=jnp.float32) / lrmult
    out3 = jax.block_until_ready(
        linear_elr_forward(x3, w3, bias, lrmult=lrmult,
                           norm=None, act_negative_slope=0.2, tk=128))
    ref3 = linear_elr_reference(x3, w3, bias, lrmult=lrmult,
                                norm=None, act_negative_slope=0.2)
    assert out3.shape == (B, outch)
    assert jnp.allclose(out3, ref3, atol=7.5e-2, rtol=5e-2), "mismatch (K-accum)"

    print("KERNEL_OK")
</pallas_src>

<mosaic_0001>
module attributes {stable_mosaic.version = 11 : i64} {
  func.func @_linear_elr_kernel_1k(%arg0: i32, %arg1: i32, %arg2: memref<16x128xbf16, #tpu.memory_space<vmem>>, %arg3: memref<128x128xbf16, #tpu.memory_space<vmem>>, %arg4: memref<1x128xf32, #tpu.memory_space<vmem>>, %arg5: memref<1x128xf32, #tpu.memory_space<vmem>>, %arg6: memref<16x128xf32, #tpu.memory_space<vmem>>) attributes {dimension_semantics = [#tpu.dimension_semantics<parallel>, #tpu.dimension_semantics<parallel>], iteration_bounds = array<i64: 1, 1>, scalar_prefetch = 0 : i64, scratch_operands = 0 : i64, tpu.core_type = #tpu.core_type<tc>, window_params = [{transform_indices = @transform_0, window_bounds = array<i64: 16, 128>}, {transform_indices = @transform_1, window_bounds = array<i64: 128, 128>}, {transform_indices = @transform_2, window_bounds = array<i64: 1, 128>}, {transform_indices = @transform_3, window_bounds = array<i64: 1, 128>}, {transform_indices = @transform_4, window_bounds = array<i64: 16, 128>}]} {
    %c0 = arith.constant 0 : index
    %c0_0 = arith.constant 0 : index
    %0 = vector.load %arg2[%c0, %c0_0] : memref<16x128xbf16, #tpu.memory_space<vmem>>, vector<16x128xbf16>
    %c0_1 = arith.constant 0 : index
    %c0_2 = arith.constant 0 : index
    %1 = vector.load %arg3[%c0_1, %c0_2] : memref<128x128xbf16, #tpu.memory_space<vmem>>, vector<128x128xbf16>
    %cst = arith.constant dense<0.000000e+00> : vector<16x128xf32>
    %2 = tpu.matmul %0, %1, %cst {dimension_numbers = #tpu.dot_dimension_numbers<[1], [1], [0], [0], [0, 0, 1, 0], [], []>} : vector<16x128xbf16>, vector<128x128xbf16>, vector<16x128xf32> -> vector<16x128xf32>
    %c0_3 = arith.constant 0 : index
    %c0_4 = arith.constant 0 : index
    %3 = vector.load %arg4[%c0_3, %c0_4] : memref<1x128xf32, #tpu.memory_space<vmem>>, vector<1x128xf32>
    %c0_5 = arith.constant 0 : index
    %c0_6 = arith.constant 0 : index
    %4 = vector.load %arg5[%c0_5, %c0_6] : memref<1x128xf32, #tpu.memory_space<vmem>>, vector<1x128xf32>
    %5 = vector.broadcast %3 : vector<1x128xf32> to vector<16x128xf32>
    %6 = arith.mulf %2, %5 : vector<16x128xf32>
    %7 = vector.broadcast %4 : vector<1x128xf32> to vector<16x128xf32>
    %8 = arith.addf %6, %7 : vector<16x128xf32>
    %c0_7 = arith.constant 0 : index
    %c0_8 = arith.constant 0 : index
    %9 = vector.load %arg6[%c0_7, %c0_8] : memref<16x128xf32, #tpu.memory_space<vmem>>, vector<16x128xf32>
    tpu.vector_store %arg6[%c0_7, %c0_8], %8 {strides = array<i32>} : memref<16x128xf32, #tpu.memory_space<vmem>>, vector<16x128xf32>,
    return
  }
  func.func @transform_0(%arg0: i32, %arg1: i32) -> (i32, i32) {
    %c0_i32 = arith.constant 0 : i32
    %c0_i32_0 = arith.constant 0 : i32
    return %arg0, %c0_i32 : i32, i32
  }
  func.func @transform_1(%arg0: i32, %arg1: i32) -> (i32, i32) {
    %c0_i32 = arith.constant 0 : i32
    %c0_i32_0 = arith.constant 0 : i32
    return %arg1, %c0_i32 : i32, i32
  }
  func.func @transform_2(%arg0: i32, %arg1: i32) -> (i32, i32) {
    %c0_i32 = arith.constant 0 : i32
    %c0_i32_0 = arith.constant 0 : i32
    return %c0_i32, %arg1 : i32, i32
  }
  func.func @transform_3(%arg0: i32, %arg1: i32) -> (i32, i32) {
    %c0_i32 = arith.constant 0 : i32
    %c0_i32_0 = arith.constant 0 : i32
    return %c0_i32, %arg1 : i32, i32
  }
  func.func @transform_4(%arg0: i32, %arg1: i32) -> (i32, i32) {
    %c0_i32 = arith.constant 0 : i32
    return %arg0, %arg1 : i32, i32
  }
}

</mosaic_0001>

<llo_original>
// kernel: tpu_custom_call.1
$region0: #{tpu_custom_call.1}
  #allocation0 [shape = 'u32[]', space=smem, size = 0x4, offset = 0x4, fixed_abs, tag = 'smem constant byte address 0x4 - core index']
  #allocation1 [shape = 'u32[144,128]{1,0:T(1,128)}', space=vmem, size = 0x12000, scoped, tag = 'internal scratch']
  %s0 = inlined_call_operand.hbm [shape: bf16[16,128], index: 0, kind: input, shape index: {}]
  %s1 = inlined_call_operand.hbm [shape: bf16[128,128], index: 1, kind: input, shape index: {}]
  %s2 = inlined_call_operand.vmem [shape: f32[1,128], index: 2, kind: input, shape index: {}]
  %s3 = inlined_call_operand.vmem [shape: f32[1,128], index: 3, kind: input, shape index: {}]
  %s4 = inlined_call_operand.hbm [shape: f32[16,128], index: 4, kind: output, shape index: {}]
  %s5 = sld [smem:[#allocation0]]
  $region34: #{tpu_custom_call.1} parent=0
    _
  %s7 = ssub.s32 1, %s5
  %s8 = scalar_select 0, %s7, %s5
  $region1: #{tpu_custom_call.1} parent=0
    #allocation2 [shape = 'u8[4096]{0}', space=vmem, size = 0x1000, scoped, tag = 'input window, operand 0, single buffered']
    #allocation3 [shape = 's32[1]{0}', space=sflag, size = 0x4, scoped, tag = 'scoped memory for tpu_custom_call.1']
    #allocation4 [shape = 's32[1]{0}', space=sflag, size = 0x4, scoped, tag = 'scoped memory for tpu_custom_call.1']
    #allocation5 [shape = 'u8[32768]{0}', space=vmem, size = 0x8000, scoped, tag = 'input window, operand 1, single buffered']
    #allocation6 [shape = 's32[1]{0}', space=sflag, size = 0x4, scoped, tag = 'scoped memory for tpu_custom_call.1']
    #allocation7 [shape = 'u8[8192]{0}', space=vmem, size = 0x2000, scoped, tag = 'output window, operand 0, single buffered']
    %9 = vsyncpa [#allocation3], 0
    %10 = vsyncpa [#allocation6], 0
    %11 = vsyncpa [#allocation4], 0
    // Predicated region
    $region2: #{tpu_custom_call.1} parent=1 // pred_check
      _
    $region3: #{tpu_custom_call.1} parent=1 // pred_check_branch
      %13 = sbr.rel (0) target = $region5
    $region4: #{tpu_custom_call.1} parent=1 // pred_region
      %s15 = ssub.s32 128, 128
      %16 = vsyncadd [#allocation3], %s15
      %s17 = sshll.u32 [#allocation2], 4
      %s18 = int_to_ptr.vmem [resolvable:$true] %s17
      %23 = dma.hbm_to_vmem [thread:$0]  %s0, 128, %s18, [#allocation3], 64, 64, 4
    $region5: #{tpu_custom_call.1} parent=1 // pred_fallthru
      _
    // Predicated region
    $region6: #{tpu_custom_call.1} parent=1 // pred_check
      _
    $region7: #{tpu_custom_call.1} parent=1 // pred_check_branch
      %25 = sbr.rel (0) target = $region9
    $region8: #{tpu_custom_call.1} parent=1 // pred_region
      %s27 = ssub.s32 1024, 1024
      %28 = vsyncadd [#allocation6], %s27
      %s29 = sshll.u32 [#allocation5], 4
      %s30 = int_to_ptr.vmem [resolvable:$true] %s29
      %35 = dma.hbm_to_vmem [thread:$0]  %s1, 1024, %s30, [#allocation6], 64, 64, 4
    $region9: #{tpu_custom_call.1} parent=1 // pred_fallthru
      _
    // Predicated region
    $region10: #{tpu_custom_call.1} parent=1 // pred_check
      _
    $region11: #{tpu_custom_call.1} parent=1 // pred_check_branch
      %37 = sbr.rel (0) target = $region13
    $region12: #{tpu_custom_call.1} parent=1 // pred_region
      _
    $region13: #{tpu_custom_call.1} parent=1 // pred_fallthru
      _
    // Predicated region
    $region14: #{tpu_custom_call.1} parent=1 // pred_check
      _
    $region15: #{tpu_custom_call.1} parent=1 // pred_check_branch
      %39 = sbr.rel (0) target = $region17
    $region16: #{tpu_custom_call.1} parent=1 // pred_region
      _
    $region17: #{tpu_custom_call.1} parent=1 // pred_fallthru
      _
    // Predicated region
    $region18: #{tpu_custom_call.1} parent=1 // pred_check
      _
    $region19: #{tpu_custom_call.1} parent=1 // pred_check_branch
      %41 = sbr.rel (0) target = $region21
    $region20: #{tpu_custom_call.1} parent=1 // pred_region
      %42 = dma.done [#allocation3], 128
    $region21: #{tpu_custom_call.1} parent=1 // pred_fallthru
      _
    // Predicated region
    $region22: #{tpu_custom_call.1} parent=1 // pred_check
      _
    $region23: #{tpu_custom_call.1} parent=1 // pred_check_branch
      %44 = sbr.rel (0) target = $region25
    $region24: #{tpu_custom_call.1} parent=1 // pred_region
      %45 = dma.done [#allocation6], 1024
    $region25: #{tpu_custom_call.1} parent=1 // pred_fallthru
      _
    %v47 = vld [vmem:[#allocation2] sm:$0xf]
    %v48 = vld [vmem:[#allocation2 + $0x4] sm:$0xf]
    %v49 = vld [vmem:[#allocation5] sm:$0xf]
    %v50 = vld [vmem:[#allocation5 + $0x4] sm:$0xf]
    %v51 = vld [vmem:[#allocation5 + $0x8] sm:$0xf]
    %v52 = vld [vmem:[#allocation5 + $0xc] sm:$0xf]
    %v53 = vld [vmem:[#allocation5 + $0x10] sm:$0xf]
    %v54 = vld [vmem:[#allocation5 + $0x14] sm:$0xf]
    %v55 = vld [vmem:[#allocation5 + $0x18] sm:$0xf]
    %v56 = vld [vmem:[#allocation5 + $0x1c] sm:$0xf]
    %v57 = vld [vmem:[#allocation5 + $0x20] sm:$0xf]
    %v58 = vld [vmem:[#allocation5 + $0x24] sm:$0xf]
    %v59 = vld [vmem:[#allocation5 + $0x28] sm:$0xf]
    %v60 = vld [vmem:[#allocation5 + $0x2c] sm:$0xf]
    %v61 = vld [vmem:[#allocation5 + $0x30] sm:$0xf]
    %v62 = vld [vmem:[#allocation5 + $0x34] sm:$0xf]
    %v63 = vld [vmem:[#allocation5 + $0x38] sm:$0xf]
    %v64 = vld [vmem:[#allocation5 + $0x3c] sm:$0xf]
    %v67 = vunpack.c.l.b16 %v47
    %v68 = vunpack.c.l.b16 %v48
    %v69 = vpack.c.b16 %v68, %v67
    %v87 = vunpack.c.l.b16 %v49
    %v88 = vunpack.c.l.b16 %v50
    %v89 = vunpack.c.l.b16 %v51
    %v90 = vunpack.c.l.b16 %v52
    %v91 = vunpack.c.l.b16 %v53
    %v92 = vunpack.c.l.b16 %v54
    %v93 = vunpack.c.l.b16 %v55
    %v94 = vunpack.c.l.b16 %v56
    %v95 = vunpack.c.l.b16 %v57
    %v96 = vunpack.c.l.b16 %v58
    %v97 = vunpack.c.l.b16 %v59
    %v98 = vunpack.c.l.b16 %v60
    %v99 = vunpack.c.l.b16 %v61
    %v100 = vunpack.c.l.b16 %v62
    %v101 = vunpack.c.l.b16 %v63
    %v102 = vunpack.c.l.b16 %v64
    %v103 = vpack.c.b16 %v88, %v87
    %v104 = vpack.c.b16 %v90, %v89
    %v105 = vpack.c.b16 %v92, %v91
    %v106 = vpack.c.b16 %v94, %v93
    %v107 = vpack.c.b16 %v96, %v95
    %v108 = vpack.c.b16 %v98, %v97
    %v109 = vpack.c.b16 %v100, %v99
    %v110 = vpack.c.b16 %v102, %v101
    %119 = vmatprep.subr.bf16.mxu0 0
    %120 = vmatpush1.bf16.xpose.msra.mxu0 %v103
    %121 = vmatprep.subr.bf16.mxu0 0
    %122 = vmatpush1.bf16.xpose.msra.mxu0 %v104
    %123 = vmatprep.subr.bf16.mxu0 0
    %124 = vmatpush1.bf16.xpose.msra.mxu0 %v105
    %125 = vmatprep.subr.bf16.mxu0 0
    %126 = vmatpush1.bf16.xpose.msra.mxu0 %v106
    %127 = vmatprep.subr.bf16.mxu0 0
    %128 = vmatpush1.bf16.xpose.msra.mxu0 %v107
    %129 = vmatprep.subr.bf16.mxu0 0
    %130 = vmatpush1.bf16.xpose.msra.mxu0 %v108
    %131 = vmatprep.subr.bf16.mxu0 0
    %132 = vmatpush1.bf16.xpose.msra.mxu0 %v109
    %133 = vmatprep.subr.bf16.mxu0 0
    %134 = vmatpush1.bf16.xpose.msra.mxu0 %v110
    %135 = vmatprep.subr.bf16.mxu0 0
    %136 = vmatpush1.bf16.xpose.msra.mxu0 0
    %137 = vmatprep.subr.bf16.mxu0 0
    %138 = vmatpush1.bf16.xpose.msra.mxu0 0
    %139 = vmatprep.subr.bf16.mxu0 0
    %140 = vmatpush1.bf16.xpose.msra.mxu0 0
    %141 = vmatprep.subr.bf16.mxu0 0
    %142 = vmatpush1.bf16.xpose.msra.mxu0 0
    %143 = vmatprep.subr.bf16.mxu0 0
    %144 = vmatpush1.bf16.xpose.msra.mxu0 0
    %145 = vmatprep.subr.bf16.mxu0 0
    %146 = vmatpush1.bf16.xpose.msra.mxu0 0
    %147 = vmatprep.subr.bf16.mxu0 0
    %148 = vmatpush1.bf16.xpose.msra.mxu0 0
    %149 = vmatprep.subr.bf16.mxu0 0
    %150 = vmatpush1.bf16.xpose.msra.mxu0 0
    %151 = vmatprep.mubr.bf16.mxu0 0
    %152 = vmatmul.mubr.bf16.gmra.mrb[0].mxu0 %v69
    %v153 = vpop.f32.mrb[0].mxu0
    %v154 = vadd.f32 0.0, %v153
    %v155 = vpop.f32.mrb[0].mxu0
    %v156 = vpop.f32.mrb[0].mxu0
    %v157 = vadd.f32 0.0, %v156
    %v158 = vpop.f32.mrb[0].mxu0
    %159 = vdwg.mxu0
    %v160 = vld [vmem:[%s2] sm:$0x1]
    %v161 = vld [vmem:[%s3] sm:$0x1]
    %v163 = vlaneseq
    %v164 = vshrl.u32 %v163, 7
    %v165 = vsub.s32 0, %v164
    %v166 = vrot.slane %v160, %v165
    %v168 = vmul.f32 %v154, %v166
    %v169 = vmul.f32 %v157, %v166
    %v171 = vlaneseq
    %v172 = vshrl.u32 %v171, 7
    %v173 = vsub.s32 0, %v172
    %v174 = vrot.slane %v161, %v173
    %v176 = vadd.f32 %v168, %v174
    %v177 = vadd.f32 %v169, %v174
    %178 = vst [vmem:[#allocation7] sm:$0xff] %v176
    %179 = vst [vmem:[#allocation7 + $0x8] sm:$0xff] %v177
    // Predicated region
    $region26: #{tpu_custom_call.1} parent=1 // pred_check
      _
    $region27: #{tpu_custom_call.1} parent=1 // pred_check_branch
      %181 = sbr.rel (0) target = $region29
    $region28: #{tpu_custom_call.1} parent=1 // pred_region
      %s183 = ssub.s32 256, 256
      %184 = vsyncadd [#allocation4], %s183
      %s185 = sshll.u32 [#allocation7], 4
      %s186 = int_to_ptr.vmem [resolvable:$true] %s185
      %191 = dma.vmem_to_hbm [thread:$0]  %s186, 256, %s4, [#allocation4], 128, 128, 8
    $region29: #{tpu_custom_call.1} parent=1 // pred_fallthru
      _
    // Predicated region
    $region30: #{tpu_custom_call.1} parent=1 // pred_check
      _
    $region31: #{tpu_custom_call.1} parent=1 // pred_check_branch
      %193 = sbr.rel (0) target = $region33
    $region32: #{tpu_custom_call.1} parent=1 // pred_region
      %194 = dma.done [#allocation4], 256
    $region33: #{tpu_custom_call.1} parent=1 // pred_fallthru
      _
    %195 = vsyncpa [#allocation3], 1
    %196 = vsyncpa [#allocation6], 1
    %197 = vsyncpa [#allocation4], 1

</llo_original>
